<compile_context>
chip_gen: v5e
topology: v5e:2x2
jax: 0.10.0
libtpu: 0.0.40
codegen_flags: <defaults>
</compile_context>

<pallas_src>
import functools
import math

import jax
import jax.numpy as jnp
from jax.experimental import pallas as pl
from jax.experimental.pallas import tpu as pltpu


def _muse_kernel(d_k, d_v, h, S, Bt, dense_out,
                 qkv_in,                         # (N, 3*d_model) f32: [q | k | v]
                 w_qkv, b_qkv,                   # fused block-diagonal QKV projection
                 w_out, b_out,                   # fused [fc_o | conv1 | conv3 | conv5]
                 k_mask, v_mask, head_ones,      # precomputed bf16 head block masks
                 dw3_w, dw3_b, dw5_w, dw5_b,     # depthwise conv weights (f32)
                 out_ref,                        # (N, d_model) or lane-dense (N*d_model/128, 128)
                 tmp_ref):                       # (N, d_model) VMEM scratch (dense store path)
    f32 = jnp.float32
    bf16 = jnp.bfloat16
    HK = h * d_k
    C = h * d_v
    HS = h * S
    N = Bt * S

    # --- fused Q/K/V projection: ONE MXU matmul (1/sqrt(d_k) folded into the Q block) ---
    qkv = jnp.dot(qkv_in[...].astype(bf16), w_qkv[...],
                  preferred_element_type=f32) + b_qkv[...]       # (N, 2*HK + C)
    qp = qkv[:, :HK]
    kp = qkv[:, HK:2 * HK]
    vp = qkv[:, 2 * HK:]                                         # (N, C), also feeds conv branch

    # --- all heads at once: replicate K h times along an (h*S) row axis and zero the
    #     off-head blocks with a precomputed bf16 0/1 mask multiply (applied post-cast) ---
    qp3 = qp.reshape(Bt, S, HK).astype(bf16)
    k_blk = (jnp.concatenate([kp.reshape(Bt, S, HK)] * h, axis=1).astype(bf16)
             * k_mask[...])                                      # (Bt, HS, HK)

    # scores[b, i, hh*S + j] = <q_hh(i), k_hh(j)> / sqrt(d_k)
    scores = jnp.einsum("bik,bjk->bij", qp3, k_blk,
                        preferred_element_type=f32)              # (Bt, S, HS)
    # NOTE: row max is over all heads' columns -- a valid softmax shift at these magnitudes.
    m = jnp.max(scores, axis=-1, keepdims=True)
    e = jnp.exp(scores - m).reshape(N, HS)
    # per-head softmax denominators via one tiny bf16 block-mask matmul
    denom = jnp.dot(e.astype(bf16), head_ones[...], preferred_element_type=f32)
    att = (e * pl.reciprocal(denom, approx=True)).reshape(Bt, S, HS).astype(bf16)
    # TODO(synk): nn.Dropout(0.1) on the attention map is identity (inference / eval mode only).

    # V replicated + masked only now, after scores/e are consumed (smaller peak live set)
    v_blk = (jnp.concatenate([vp.reshape(Bt, S, C)] * h, axis=1).astype(bf16)
             * v_mask[...])                                      # (Bt, HS, C)
    # ctx[b, i, hh*d_v + d] = sum_j att_hh(i, j) * v_hh(j, d)   (heads pre-concatenated)
    ctx = jnp.einsum("bij,bjc->bic", att, v_blk,
                     preferred_element_type=f32).reshape(N, C)

    # --- multi-scale depthwise convs over the sequence axis (f32, VPU); neighbours are
    #     built with XLU rolls ONCE and shared by the k=3 and k=5 kernels ---
    row_in_seq = jax.lax.broadcasted_iota(jnp.int32, (N, 1), 0) % S

    def neighbor(t):                     # row i -> vp[i + t], zero-padded per sequence
        rolled = pltpu.roll(vp, shift=(-t) % N, axis=0)
        valid = (row_in_seq + t >= 0) & (row_in_seq + t < S)
        return jnp.where(valid, rolled, 0.0)

    nm2, nm1, np1, np2 = neighbor(-2), neighbor(-1), neighbor(1), neighbor(2)
    w3 = dw3_w[...]
    w5 = dw5_w[...]
    d3 = nm1 * w3[0:1] + vp * w3[1:2] + np1 * w3[2:3] + dw3_b[...]
    d5 = (nm2 * w5[0:1] + nm1 * w5[1:2] + vp * w5[2:3]
          + np1 * w5[3:4] + np2 * w5[4:5] + dw5_b[...])

    # --- single fused output matmul: [attn ctx | conv1 | conv3 | conv5] @ w_out (K = 4*C) ---
    feats = jnp.concatenate([ctx, vp, d3, d5], axis=1).astype(bf16)   # (N, 4*C)
    out = jnp.dot(feats, w_out[...], preferred_element_type=f32) + b_out[...]
    out = out.astype(out_ref.dtype)

    if dense_out:
        # Lane-dense store: regroup `grp` consecutive (seq-position) rows into the
        # 128-lane axis (via a tiny VMEM scratch + strided sublane loads) so the
        # block is written with unmasked full-lane stores and a dense DMA.
        d_model = out.shape[1]
        grp = 128 // d_model
        rows = N // grp
        tmp_ref[...] = out
        pieces = [tmp_ref[pl.ds(j, rows, stride=grp), :] for j in range(grp)]
        out_ref[...] = jnp.concatenate(pieces, axis=1)               # (rows, 128)
    else:
        out_ref[...] = out


def _pick_block_b(B, S):
    """Batch elements folded into one grid step.

    The grid is a sequential loop on a single TensorCore, so default to ONE
    grid step (Bt = B).  Only split into two steps -- which lets v7x's second
    core share the work via the "parallel" dimension semantics -- when each
    half still feeds the MXU >= 128 rows and keeps multiple-of-8 sublane tiles.
    On v5e/v6e the extra step would just add ~0.35us overhead for nothing.
    """
    if B % 2 == 0 and (B // 2) * S >= 128 and ((B // 2) * S) % 8 == 0:
        return B // 2
    return B


def muse_attention(queries, keys, values, params, *, d_k, d_v, h, block_b=None):
    """Fused MUSEAttention forward (eval mode) as a single Pallas TPU kernel."""
    B, S, d_model = queries.shape
    f32, bf16 = jnp.float32, jnp.bfloat16
    HK, C, HS = h * d_k, h * d_v, h * S

    # dy_paras = softmax(dy_paras), as in the PyTorch forward.  Fold the mixing
    # coefficients and the attention scale into the (tiny) weights host-side so
    # the kernel only sees pre-transposed, pre-scaled bf16 MXU operands.
    dy = jax.nn.softmax(params["dy_paras"].astype(f32))
    scale = 1.0 / math.sqrt(d_k)

    # fused block-diagonal QKV projection (x @ W form)
    w_qkv = jnp.zeros((3 * d_model, 2 * HK + C), f32)
    w_qkv = w_qkv.at[:d_model, :HK].set(params["wq"].T * scale)
    w_qkv = w_qkv.at[d_model:2 * d_model, HK:2 * HK].set(params["wk"].T)
    w_qkv = w_qkv.at[2 * d_model:, 2 * HK:].set(params["wv"].T)
    w_qkv = w_qkv.astype(bf16)
    b_qkv = jnp.concatenate([params["bq"] * scale, params["bk"], params["bv"]],
                            axis=1).astype(f32)                  # (1, 2*HK + C)

    # fused output projection over [attn ctx | conv1 | conv3 | conv5] features
    w_out = jnp.concatenate(
        [params["wo"].T,
         dy[0] * params["pw1_w"].T,
         dy[1] * params["pw3_w"].T,
         dy[2] * params["pw5_w"].T], axis=0).astype(bf16)        # (4*C, d_model)
    b_out = (params["bo"] + dy[0] * params["pw1_b"] + dy[1] * params["pw3_b"]
             + dy[2] * params["pw5_b"]).astype(f32)              # (1, d_model)

    # precomputed head block masks (replace per-step iota/compare/select chains)
    row_head = jnp.arange(HS, dtype=jnp.int32)[:, None] // S
    k_mask = (row_head == (jnp.arange(HK, dtype=jnp.int32)[None, :] // d_k)).astype(bf16)
    v_mask = (row_head == (jnp.arange(C, dtype=jnp.int32)[None, :] // d_v)).astype(bf16)
    head_ones = (row_head == (jnp.arange(HS, dtype=jnp.int32)[None, :] // S)).astype(bf16)

    dw3_w = params["dw3_w"].astype(f32)
    dw3_b = params["dw3_b"].astype(f32)
    dw5_w = params["dw5_w"].astype(f32)
    dw5_b = params["dw5_b"].astype(f32)

    Bt = block_b if block_b is not None else _pick_block_b(B, S)
    assert B % Bt == 0, (B, Bt)
    N = Bt * S
    n_blocks = B // Bt

    # one fused (B*S, 3*d_model) sequence input -> single QKV matmul + one DMA stream
    qkv_in = jnp.concatenate(
        [queries.reshape(B * S, d_model),
         keys.reshape(B * S, d_model),
         values.reshape(B * S, d_model)], axis=1)

    # lane-dense output path (last dim 128) when the per-block element count allows it
    dense_out = (d_model < 128 and 128 % d_model == 0 and (N * d_model) % 128 == 0
                 and (n_blocks == 1 or (N * d_model // 128) % 8 == 0))
    if dense_out:
        out_rows = N * d_model // 128
        out_shape = jax.ShapeDtypeStruct((n_blocks * out_rows, 128), queries.dtype)
        out_spec = pl.BlockSpec((out_rows, 128), lambda b: (b, 0))
    else:
        out_shape = jax.ShapeDtypeStruct((B * S, d_model), queries.dtype)
        out_spec = pl.BlockSpec((N, d_model), lambda b: (b, 0))

    seq_spec = pl.BlockSpec((N, 3 * d_model), lambda b: (b, 0))
    weights = [w_qkv, b_qkv, w_out, b_out, k_mask, v_mask, head_ones,
               dw3_w, dw3_b, dw5_w, dw5_b]

    def _const_spec(shape):
        n = len(shape)
        return pl.BlockSpec(shape, lambda b, _n=n: (0,) * _n)

    in_specs = [seq_spec] + [_const_spec(w.shape) for w in weights]
    kernel = functools.partial(_muse_kernel, d_k, d_v, h, S, Bt, dense_out)

    # TODO(synk): for long sequences the (S, h*S) score block should be tiled over KV
    # chunks (flash-style online softmax, per-head) to respect v7x's 64 MiB VMEM and
    # avoid the h-fold K/V replication; at these shapes the working set is a few KiB.
    out = pl.pallas_call(
        kernel,
        out_shape=out_shape,
        grid=(n_blocks,),
        in_specs=in_specs,
        out_specs=out_spec,
        scratch_shapes=[pltpu.VMEM((N, d_model), queries.dtype)],
        compiler_params=pltpu.CompilerParams(dimension_semantics=("parallel",)),
    )(qkv_in, *weights)
    return out.reshape(B, S, d_model)


def init_params(key, d_model, d_k, d_v, h):
    """Deterministic synthetic parameters (shapes match the PyTorch module)."""
    C = h * d_v
    ks = jax.random.split(key, 16)
    std = 0.001  # module's init_weights: Linear ~ N(0, 0.001), bias = 0
    p = {
        "wq": std * jax.random.normal(ks[0], (h * d_k, d_model), jnp.float32),
        "bq": jnp.zeros((1, h * d_k), jnp.float32),
        "wk": std * jax.random.normal(ks[1], (h * d_k, d_model), jnp.float32),
        "bk": jnp.zeros((1, h * d_k), jnp.float32),
        "wv": std * jax.random.normal(ks[2], (h * d_v, d_model), jnp.float32),
        "bv": jnp.zeros((1, h * d_v), jnp.float32),
        "wo": std * jax.random.normal(ks[3], (d_model, h * d_v), jnp.float32),
        "bo": jnp.zeros((1, d_model), jnp.float32),
        # conv1: pointwise 1x1 (C -> d_model)
        "pw1_w": jax.random.normal(ks[4], (d_model, C), jnp.float32) / math.sqrt(C),
        "pw1_b": 0.1 * jax.random.normal(ks[5], (1, d_model), jnp.float32),
        # conv3: depthwise (k=3) + pointwise; depthwise weight stored as (k, C)
        "dw3_w": jax.random.normal(ks[6], (3, C), jnp.float32) / math.sqrt(3.0),
        "dw3_b": 0.1 * jax.random.normal(ks[7], (1, C), jnp.float32),
        "pw3_w": jax.random.normal(ks[8], (d_model, C), jnp.float32) / math.sqrt(C),
        "pw3_b": 0.1 * jax.random.normal(ks[9], (1, d_model), jnp.float32),
        # conv5: depthwise (k=5) + pointwise
        "dw5_w": jax.random.normal(ks[10], (5, C), jnp.float32) / math.sqrt(5.0),
        "dw5_b": 0.1 * jax.random.normal(ks[11], (1, C), jnp.float32),
        "pw5_w": jax.random.normal(ks[12], (d_model, C), jnp.float32) / math.sqrt(C),
        "pw5_b": 0.1 * jax.random.normal(ks[13], (1, d_model), jnp.float32),
        "dy_paras": jnp.ones((3,), jnp.float32),
    }
    return p


def muse_reference(queries, keys, values, p, *, d_k, d_v, h):
    """Pure-JAX f32 reference mirroring the PyTorch forward (eval mode)."""
    B, S, d_model = queries.shape
    C = h * d_v
    q = queries @ p["wq"].T + p["bq"]
    k = keys @ p["wk"].T + p["bk"]
    v = values @ p["wv"].T + p["bv"]
    q = q.reshape(B, S, h, d_k).transpose(0, 2, 1, 3)          # (B,h,S,d_k)
    k = k.reshape(B, S, h, d_k).transpose(0, 2, 3, 1)          # (B,h,d_k,S)
    v = v.reshape(B, S, h, d_v).transpose(0, 2, 1, 3)          # (B,h,S,d_v)
    att = (q @ k) / math.sqrt(d_k)
    att = jax.nn.softmax(att, axis=-1)
    out = (att @ v).transpose(0, 2, 1, 3).reshape(B, S, C)
    out = out @ p["wo"].T + p["bo"]

    v2 = v.transpose(0, 1, 3, 2).reshape(B, C, S)              # (B, C, S)
    dy = jax.nn.softmax(p["dy_paras"])

    def pointwise(x, w, b):
        return jnp.einsum("oc,bcs->bos", w, x) + b.reshape(1, d_model, 1)

    def depthwise(x, w, b, ksz):
        pad = ksz // 2
        xp = jnp.pad(x, ((0, 0), (0, 0), (pad, pad)))
        acc = jnp.zeros_like(x)
        for r in range(ksz):
            acc = acc + xp[:, :, r:r + S] * w[r, :].reshape(1, C, 1)
        return acc + b.reshape(1, C, 1)

    c1 = pointwise(v2, p["pw1_w"], p["pw1_b"])
    c3 = pointwise(depthwise(v2, p["dw3_w"], p["dw3_b"], 3), p["pw3_w"], p["pw3_b"])
    c5 = pointwise(depthwise(v2, p["dw5_w"], p["dw5_b"], 5), p["pw5_w"], p["pw5_b"])
    out2 = dy[0] * c1 + dy[1] * c3 + dy[2] * c5                # (B, d_model, S)
    return out + out2.transpose(0, 2, 1)


if __name__ == "__main__":
    d_model, d_k, d_v, h = 32, 8, 8, 4
    root = jax.random.PRNGKey(0)
    k_in, k_par = jax.random.split(root)
    params = init_params(k_par, d_model, d_k, d_v, h)

    # (B=2) and (B=8): both run as a single grid step (single-TC friendly) with a
    # lane-dense (rows, 128) output store.
    for B, S in ((2, 8), (8, 8)):
        kq, kk, kv = jax.random.split(jax.random.fold_in(k_in, B), 3)
        queries = jax.random.normal(kq, (B, S, d_model), jnp.float32)
        keys = jax.random.normal(kk, (B, S, d_model), jnp.float32)
        values = jax.random.normal(kv, (B, S, d_model), jnp.float32)

        out = muse_attention(queries, keys, values, params, d_k=d_k, d_v=d_v, h=h)
        out = jax.block_until_ready(out)

        ref = muse_reference(queries, keys, values, params, d_k=d_k, d_v=d_v, h=h)
        assert out.shape == (B, S, d_model)
        err = jnp.max(jnp.abs(out - ref))
        # bf16 MXU operands vs f32 reference -> slightly looser tolerance
        assert jnp.allclose(out, ref, atol=2e-3, rtol=2e-3), f"max abs err {err}"

    print("KERNEL_OK")
</pallas_src>

<mosaic_0001>
module attributes {stable_mosaic.version = 11 : i64} {
  func.func @_muse_kernel(%arg0: i32, %arg1: memref<16x96xf32, #tpu.memory_space<vmem>>, %arg2: memref<96x96xbf16, #tpu.memory_space<vmem>>, %arg3: memref<1x96xf32, #tpu.memory_space<vmem>>, %arg4: memref<128x32xbf16, #tpu.memory_space<vmem>>, %arg5: memref<1x32xf32, #tpu.memory_space<vmem>>, %arg6: memref<32x32xbf16, #tpu.memory_space<vmem>>, %arg7: memref<32x32xbf16, #tpu.memory_space<vmem>>, %arg8: memref<32x32xbf16, #tpu.memory_space<vmem>>, %arg9: memref<3x32xf32, #tpu.memory_space<vmem>>, %arg10: memref<1x32xf32, #tpu.memory_space<vmem>>, %arg11: memref<5x32xf32, #tpu.memory_space<vmem>>, %arg12: memref<1x32xf32, #tpu.memory_space<vmem>>, %arg13: memref<4x128xf32, #tpu.memory_space<vmem>>, %arg14: memref<16x32xf32, #tpu.memory_space<vmem>>) attributes {dimension_semantics = [#tpu.dimension_semantics<parallel>], iteration_bounds = array<i64: 1>, scalar_prefetch = 0 : i64, scratch_operands = 1 : i64, tpu.core_type = #tpu.core_type<tc>, window_params = [{transform_indices = @transform_0, window_bounds = array<i64: 16, 96>}, {pipeline_mode = #tpu.pipeline_mode<synchronous>, transform_indices = @transform_1, window_bounds = array<i64: 96, 96>}, {pipeline_mode = #tpu.pipeline_mode<synchronous>, transform_indices = @transform_2, window_bounds = array<i64: 1, 96>}, {pipeline_mode = #tpu.pipeline_mode<synchronous>, transform_indices = @transform_3, window_bounds = array<i64: 128, 32>}, {pipeline_mode = #tpu.pipeline_mode<synchronous>, transform_indices = @transform_4, window_bounds = array<i64: 1, 32>}, {pipeline_mode = #tpu.pipeline_mode<synchronous>, transform_indices = @transform_5, window_bounds = array<i64: 32, 32>}, {pipeline_mode = #tpu.pipeline_mode<synchronous>, transform_indices = @transform_6, window_bounds = array<i64: 32, 32>}, {pipeline_mode = #tpu.pipeline_mode<synchronous>, transform_indices = @transform_7, window_bounds = array<i64: 32, 32>}, {pipeline_mode = #tpu.pipeline_mode<synchronous>, transform_indices = @transform_8, window_bounds = array<i64: 3, 32>}, {pipeline_mode = #tpu.pipeline_mode<synchronous>, transform_indices = @transform_9, window_bounds = array<i64: 1, 32>}, {pipeline_mode = #tpu.pipeline_mode<synchronous>, transform_indices = @transform_10, window_bounds = array<i64: 5, 32>}, {pipeline_mode = #tpu.pipeline_mode<synchronous>, transform_indices = @transform_11, window_bounds = array<i64: 1, 32>}, {transform_indices = @transform_12, window_bounds = array<i64: 4, 128>}]} {
    %c0 = arith.constant 0 : index
    %c0_0 = arith.constant 0 : index
    %0 = vector.load %arg1[%c0, %c0_0] : memref<16x96xf32, #tpu.memory_space<vmem>>, vector<16x96xf32>
    %1 = arith.truncf %0 : vector<16x96xf32> to vector<16x96xbf16>
    %c0_1 = arith.constant 0 : index
    %c0_2 = arith.constant 0 : index
    %2 = vector.load %arg2[%c0_1, %c0_2] : memref<96x96xbf16, #tpu.memory_space<vmem>>, vector<96x96xbf16>
    %cst = arith.constant dense<0.000000e+00> : vector<16x96xf32>
    %3 = tpu.matmul %1, %2, %cst {dimension_numbers = #tpu.dot_dimension_numbers<[1], [0], [0], [1], [0, 0, 1, 1], [], []>} : vector<16x96xbf16>, vector<96x96xbf16>, vector<16x96xf32> -> vector<16x96xf32>
    %c0_3 = arith.constant 0 : index
    %c0_4 = arith.constant 0 : index
    %4 = vector.load %arg3[%c0_3, %c0_4] : memref<1x96xf32, #tpu.memory_space<vmem>>, vector<1x96xf32>
    %5 = vector.broadcast %4 : vector<1x96xf32> to vector<16x96xf32>
    %6 = arith.addf %3, %5 : vector<16x96xf32>
    %7 = vector.extract_strided_slice %6 {offsets = [0, 0], sizes = [16, 32], strides = [1, 1]} : vector<16x96xf32> to vector<16x32xf32>
    %8 = vector.extract_strided_slice %6 {offsets = [0, 32], sizes = [16, 32], strides = [1, 1]} : vector<16x96xf32> to vector<16x32xf32>
    %9 = vector.extract_strided_slice %6 {offsets = [0, 64], sizes = [16, 32], strides = [1, 1]} : vector<16x96xf32> to vector<16x32xf32>
    %10 = vector.shape_cast %7 : vector<16x32xf32> to vector<2x8x32xf32>
    %11 = arith.truncf %10 : vector<2x8x32xf32> to vector<2x8x32xbf16>
    %12 = vector.shape_cast %8 : vector<16x32xf32> to vector<2x8x32xf32>
    %13 = tpu.concatenate %12, %12, %12, %12 in 1 : vector<2x8x32xf32>, vector<2x8x32xf32>, vector<2x8x32xf32>, vector<2x8x32xf32> -> vector<2x32x32xf32>
    %14 = arith.truncf %13 : vector<2x32x32xf32> to vector<2x32x32xbf16>
    %c0_5 = arith.constant 0 : index
    %c0_6 = arith.constant 0 : index
    %15 = vector.load %arg6[%c0_5, %c0_6] : memref<32x32xbf16, #tpu.memory_space<vmem>>, vector<32x32xbf16>
    %16 = vector.shape_cast %15 : vector<32x32xbf16> to vector<1x32x32xbf16>
    %17 = vector.broadcast %16 : vector<1x32x32xbf16> to vector<2x32x32xbf16>
    %18 = arith.mulf %14, %17 : vector<2x32x32xbf16>
    "tpu.trace_start"() <{level = 10 : i32, message = "bik,bjk->bij"}> : () -> ()
    %cst_7 = arith.constant dense<0.000000e+00> : vector<2x8x32xf32>
    %19 = tpu.matmul %11, %18, %cst_7 {dimension_numbers = #tpu.dot_dimension_numbers<[2], [2], [1], [1], [0, 0, 0, 1, 1, 1], [0], [0]>} : vector<2x8x32xbf16>, vector<2x32x32xbf16>, vector<2x8x32xf32> -> vector<2x8x32xf32>
    "tpu.trace_stop"() : () -> ()
    %cst_8 = arith.constant dense<0xFF800000> : vector<2x8xf32>
    %20 = vector.multi_reduction <maximumf>, %19, %cst_8 [2] : vector<2x8x32xf32> to vector<2x8xf32>
    %21 = vector.shape_cast %20 : vector<2x8xf32> to vector<2x8x1xf32>
    %22 = vector.broadcast %21 : vector<2x8x1xf32> to vector<2x8x32xf32>
    %23 = arith.subf %19, %22 : vector<2x8x32xf32>
    %24 = math.exp %23 : vector<2x8x32xf32>
    %25 = vector.shape_cast %24 : vector<2x8x32xf32> to vector<16x32xf32>
    %26 = arith.truncf %25 : vector<16x32xf32> to vector<16x32xbf16>
    %c0_9 = arith.constant 0 : index
    %c0_10 = arith.constant 0 : index
    %27 = vector.load %arg8[%c0_9, %c0_10] : memref<32x32xbf16, #tpu.memory_space<vmem>>, vector<32x32xbf16>
    %cst_11 = arith.constant dense<0.000000e+00> : vector<16x32xf32>
    %28 = tpu.matmul %26, %27, %cst_11 {dimension_numbers = #tpu.dot_dimension_numbers<[1], [0], [0], [1], [0, 0, 1, 1], [], []>} : vector<16x32xbf16>, vector<32x32xbf16>, vector<16x32xf32> -> vector<16x32xf32>
    %29 = tpu.reciprocal %28 {approx = true} : vector<16x32xf32> -> vector<16x32xf32>
    %30 = arith.mulf %25, %29 : vector<16x32xf32>
    %31 = vector.shape_cast %30 : vector<16x32xf32> to vector<2x8x32xf32>
    %32 = arith.truncf %31 : vector<2x8x32xf32> to vector<2x8x32xbf16>
    %33 = vector.shape_cast %9 : vector<16x32xf32> to vector<2x8x32xf32>
    %34 = tpu.concatenate %33, %33, %33, %33 in 1 : vector<2x8x32xf32>, vector<2x8x32xf32>, vector<2x8x32xf32>, vector<2x8x32xf32> -> vector<2x32x32xf32>
    %35 = arith.truncf %34 : vector<2x32x32xf32> to vector<2x32x32xbf16>
    %c0_12 = arith.constant 0 : index
    %c0_13 = arith.constant 0 : index
    %36 = vector.load %arg7[%c0_12, %c0_13] : memref<32x32xbf16, #tpu.memory_space<vmem>>, vector<32x32xbf16>
    %37 = vector.shape_cast %36 : vector<32x32xbf16> to vector<1x32x32xbf16>
    %38 = vector.broadcast %37 : vector<1x32x32xbf16> to vector<2x32x32xbf16>
    %39 = arith.mulf %35, %38 : vector<2x32x32xbf16>
    "tpu.trace_start"() <{level = 10 : i32, message = "bij,bjc->bic"}> : () -> ()
    %cst_14 = arith.constant dense<0.000000e+00> : vector<2x8x32xf32>
    %40 = tpu.matmul %32, %39, %cst_14 {dimension_numbers = #tpu.dot_dimension_numbers<[2], [1], [1], [2], [0, 0, 0, 1, 1, 2], [0], [0]>} : vector<2x8x32xbf16>, vector<2x32x32xbf16>, vector<2x8x32xf32> -> vector<2x8x32xf32>
    "tpu.trace_stop"() : () -> ()
    %41 = vector.shape_cast %40 : vector<2x8x32xf32> to vector<16x32xf32>
    %42 = tpu.iota {dimensions = array<i32: 0>} : vector<16x1xi32>
    %c8_i32 = arith.constant 8 : i32
    %c0_i32 = arith.constant 0 : i32
    %43 = arith.cmpi eq, %c8_i32, %c0_i32 : i32
    %c1_i32 = arith.constant 1 : i32
    %44 = arith.select %43, %c1_i32, %c8_i32 : i32
    %45 = vector.broadcast %44 : i32 to vector<16x1xi32>
    %46 = arith.remsi %42, %45 : vector<16x1xi32>
    %c0_i32_15 = arith.constant 0 : i32
    %47 = vector.broadcast %c0_i32_15 : i32 to vector<16x1xi32>
    %48 = arith.cmpi ne, %46, %47 : vector<16x1xi32>
    %c0_i32_16 = arith.constant 0 : i32
    %49 = vector.broadcast %c0_i32_16 : i32 to vector<16x1xi32>
    %50 = arith.cmpi slt, %46, %49 : vector<16x1xi32>
    %c0_i32_17 = arith.constant 0 : i32
    %51 = arith.cmpi slt, %44, %c0_i32_17 : i32
    %52 = vector.broadcast %51 : i1 to vector<16x1xi1>
    %53 = vector.broadcast %52 : vector<16x1xi1> to vector<16x1xi1>
    %54 = arith.xori %50, %53 : vector<16x1xi1>
    %55 = arith.andi %54, %48 : vector<16x1xi1>
    %56 = vector.broadcast %44 : i32 to vector<16x1xi32>
    %57 = arith.addi %46, %56 : vector<16x1xi32>
    %58 = arith.select %55, %57, %46 : vector<16x1xi1>, vector<16x1xi32>
    %c2_i32 = arith.constant 2 : i32
    %59 = tpu.dynamic_rotate %9 by %c2_i32 dim 0 : vector<16x32xf32>, i32 -> vector<16x32xf32>
    %c-2_i32 = arith.constant -2 : i32
    %60 = vector.broadcast %c-2_i32 : i32 to vector<16x1xi32>
    %61 = arith.addi %58, %60 : vector<16x1xi32>
    %c0_i32_18 = arith.constant 0 : i32
    %62 = vector.broadcast %c0_i32_18 : i32 to vector<16x1xi32>
    %63 = arith.cmpi sge, %61, %62 : vector<16x1xi32>
    %c-2_i32_19 = arith.constant -2 : i32
    %64 = vector.broadcast %c-2_i32_19 : i32 to vector<16x1xi32>
    %65 = arith.addi %58, %64 : vector<16x1xi32>
    %c8_i32_20 = arith.constant 8 : i32
    %66 = vector.broadcast %c8_i32_20 : i32 to vector<16x1xi32>
    %67 = arith.cmpi slt, %65, %66 : vector<16x1xi32>
    %68 = arith.andi %63, %67 : vector<16x1xi1>
    %cst_21 = arith.constant 0.000000e+00 : f32
    %69 = vector.shape_cast %68 : vector<16x1xi1> to vector<16x1xi1>
    %70 = vector.broadcast %69 : vector<16x1xi1> to vector<16x32xi1>
    %71 = vector.broadcast %cst_21 : f32 to vector<16x32xf32>
    %72 = arith.select %70, %59, %71 : vector<16x32xi1>, vector<16x32xf32>
    %c1_i32_22 = arith.constant 1 : i32
    %73 = tpu.dynamic_rotate %9 by %c1_i32_22 dim 0 : vector<16x32xf32>, i32 -> vector<16x32xf32>
    %c-1_i32 = arith.constant -1 : i32
    %74 = vector.broadcast %c-1_i32 : i32 to vector<16x1xi32>
    %75 = arith.addi %58, %74 : vector<16x1xi32>
    %c0_i32_23 = arith.constant 0 : i32
    %76 = vector.broadcast %c0_i32_23 : i32 to vector<16x1xi32>
    %77 = arith.cmpi sge, %75, %76 : vector<16x1xi32>
    %c-1_i32_24 = arith.constant -1 : i32
    %78 = vector.broadcast %c-1_i32_24 : i32 to vector<16x1xi32>
    %79 = arith.addi %58, %78 : vector<16x1xi32>
    %c8_i32_25 = arith.constant 8 : i32
    %80 = vector.broadcast %c8_i32_25 : i32 to vector<16x1xi32>
    %81 = arith.cmpi slt, %79, %80 : vector<16x1xi32>
    %82 = arith.andi %77, %81 : vector<16x1xi1>
    %cst_26 = arith.constant 0.000000e+00 : f32
    %83 = vector.shape_cast %82 : vector<16x1xi1> to vector<16x1xi1>
    %84 = vector.broadcast %83 : vector<16x1xi1> to vector<16x32xi1>
    %85 = vector.broadcast %cst_26 : f32 to vector<16x32xf32>
    %86 = arith.select %84, %73, %85 : vector<16x32xi1>, vector<16x32xf32>
    %c15_i32 = arith.constant 15 : i32
    %87 = tpu.dynamic_rotate %9 by %c15_i32 dim 0 : vector<16x32xf32>, i32 -> vector<16x32xf32>
    %c1_i32_27 = arith.constant 1 : i32
    %88 = vector.broadcast %c1_i32_27 : i32 to vector<16x1xi32>
    %89 = arith.addi %58, %88 : vector<16x1xi32>
    %c0_i32_28 = arith.constant 0 : i32
    %90 = vector.broadcast %c0_i32_28 : i32 to vector<16x1xi32>
    %91 = arith.cmpi sge, %89, %90 : vector<16x1xi32>
    %c1_i32_29 = arith.constant 1 : i32
    %92 = vector.broadcast %c1_i32_29 : i32 to vector<16x1xi32>
    %93 = arith.addi %58, %92 : vector<16x1xi32>
    %c8_i32_30 = arith.constant 8 : i32
    %94 = vector.broadcast %c8_i32_30 : i32 to vector<16x1xi32>
    %95 = arith.cmpi slt, %93, %94 : vector<16x1xi32>
    %96 = arith.andi %91, %95 : vector<16x1xi1>
    %cst_31 = arith.constant 0.000000e+00 : f32
    %97 = vector.shape_cast %96 : vector<16x1xi1> to vector<16x1xi1>
    %98 = vector.broadcast %97 : vector<16x1xi1> to vector<16x32xi1>
    %99 = vector.broadcast %cst_31 : f32 to vector<16x32xf32>
    %100 = arith.select %98, %87, %99 : vector<16x32xi1>, vector<16x32xf32>
    %c14_i32 = arith.constant 14 : i32
    %101 = tpu.dynamic_rotate %9 by %c14_i32 dim 0 : vector<16x32xf32>, i32 -> vector<16x32xf32>
    %c2_i32_32 = arith.constant 2 : i32
    %102 = vector.broadcast %c2_i32_32 : i32 to vector<16x1xi32>
    %103 = arith.addi %58, %102 : vector<16x1xi32>
    %c0_i32_33 = arith.constant 0 : i32
    %104 = vector.broadcast %c0_i32_33 : i32 to vector<16x1xi32>
    %105 = arith.cmpi sge, %103, %104 : vector<16x1xi32>
    %c2_i32_34 = arith.constant 2 : i32
    %106 = vector.broadcast %c2_i32_34 : i32 to vector<16x1xi32>
    %107 = arith.addi %58, %106 : vector<16x1xi32>
    %c8_i32_35 = arith.constant 8 : i32
    %108 = vector.broadcast %c8_i32_35 : i32 to vector<16x1xi32>
    %109 = arith.cmpi slt, %107, %108 : vector<16x1xi32>
    %110 = arith.andi %105, %109 : vector<16x1xi1>
    %cst_36 = arith.constant 0.000000e+00 : f32
    %111 = vector.shape_cast %110 : vector<16x1xi1> to vector<16x1xi1>
    %112 = vector.broadcast %111 : vector<16x1xi1> to vector<16x32xi1>
    %113 = vector.broadcast %cst_36 : f32 to vector<16x32xf32>
    %114 = arith.select %112, %101, %113 : vector<16x32xi1>, vector<16x32xf32>
    %c0_37 = arith.constant 0 : index
    %c0_38 = arith.constant 0 : index
    %115 = vector.load %arg9[%c0_37, %c0_38] : memref<3x32xf32, #tpu.memory_space<vmem>>, vector<3x32xf32>
    %c0_39 = arith.constant 0 : index
    %c0_40 = arith.constant 0 : index
    %116 = vector.load %arg11[%c0_39, %c0_40] : memref<5x32xf32, #tpu.memory_space<vmem>>, vector<5x32xf32>
    %117 = vector.extract_strided_slice %115 {offsets = [0, 0], sizes = [1, 32], strides = [1, 1]} : vector<3x32xf32> to vector<1x32xf32>
    %118 = vector.broadcast %117 : vector<1x32xf32> to vector<16x32xf32>
    %119 = arith.mulf %86, %118 : vector<16x32xf32>
    %120 = vector.extract_strided_slice %115 {offsets = [1, 0], sizes = [1, 32], strides = [1, 1]} : vector<3x32xf32> to vector<1x32xf32>
    %121 = vector.broadcast %120 : vector<1x32xf32> to vector<16x32xf32>
    %122 = arith.mulf %9, %121 : vector<16x32xf32>
    %123 = arith.addf %119, %122 : vector<16x32xf32>
    %124 = vector.extract_strided_slice %115 {offsets = [2, 0], sizes = [1, 32], strides = [1, 1]} : vector<3x32xf32> to vector<1x32xf32>
    %125 = vector.broadcast %124 : vector<1x32xf32> to vector<16x32xf32>
    %126 = arith.mulf %100, %125 : vector<16x32xf32>
    %127 = arith.addf %123, %126 : vector<16x32xf32>
    %c0_41 = arith.constant 0 : index
    %c0_42 = arith.constant 0 : index
    %128 = vector.load %arg10[%c0_41, %c0_42] : memref<1x32xf32, #tpu.memory_space<vmem>>, vector<1x32xf32>
    %129 = vector.broadcast %128 : vector<1x32xf32> to vector<16x32xf32>
    %130 = arith.addf %127, %129 : vector<16x32xf32>
    %131 = vector.extract_strided_slice %116 {offsets = [0, 0], sizes = [1, 32], strides = [1, 1]} : vector<5x32xf32> to vector<1x32xf32>
    %132 = vector.broadcast %131 : vector<1x32xf32> to vector<16x32xf32>
    %133 = arith.mulf %72, %132 : vector<16x32xf32>
    %134 = vector.extract_strided_slice %116 {offsets = [1, 0], sizes = [1, 32], strides = [1, 1]} : vector<5x32xf32> to vector<1x32xf32>
    %135 = vector.broadcast %134 : vector<1x32xf32> to vector<16x32xf32>
    %136 = arith.mulf %86, %135 : vector<16x32xf32>
    %137 = arith.addf %133, %136 : vector<16x32xf32>
    %138 = vector.extract_strided_slice %116 {offsets = [2, 0], sizes = [1, 32], strides = [1, 1]} : vector<5x32xf32> to vector<1x32xf32>
    %139 = vector.broadcast %138 : vector<1x32xf32> to vector<16x32xf32>
    %140 = arith.mulf %9, %139 : vector<16x32xf32>
    %141 = arith.addf %137, %140 : vector<16x32xf32>
    %142 = vector.extract_strided_slice %116 {offsets = [3, 0], sizes = [1, 32], strides = [1, 1]} : vector<5x32xf32> to vector<1x32xf32>
    %143 = vector.broadcast %142 : vector<1x32xf32> to vector<16x32xf32>
    %144 = arith.mulf %100, %143 : vector<16x32xf32>
    %145 = arith.addf %141, %144 : vector<16x32xf32>
    %146 = vector.extract_strided_slice %116 {offsets = [4, 0], sizes = [1, 32], strides = [1, 1]} : vector<5x32xf32> to vector<1x32xf32>
    %147 = vector.broadcast %146 : vector<1x32xf32> to vector<16x32xf32>
    %148 = arith.mulf %114, %147 : vector<16x32xf32>
    %149 = arith.addf %145, %148 : vector<16x32xf32>
    %c0_43 = arith.constant 0 : index
    %c0_44 = arith.constant 0 : index
    %150 = vector.load %arg12[%c0_43, %c0_44] : memref<1x32xf32, #tpu.memory_space<vmem>>, vector<1x32xf32>
    %151 = vector.broadcast %150 : vector<1x32xf32> to vector<16x32xf32>
    %152 = arith.addf %149, %151 : vector<16x32xf32>
    %153 = tpu.concatenate %41, %9, %130, %152 in 1 : vector<16x32xf32>, vector<16x32xf32>, vector<16x32xf32>, vector<16x32xf32> -> vector<16x128xf32>
    %154 = arith.truncf %153 : vector<16x128xf32> to vector<16x128xbf16>
    %c0_45 = arith.constant 0 : index
    %c0_46 = arith.constant 0 : index
    %155 = vector.load %arg4[%c0_45, %c0_46] : memref<128x32xbf16, #tpu.memory_space<vmem>>, vector<128x32xbf16>
    %cst_47 = arith.constant dense<0.000000e+00> : vector<16x32xf32>
    %156 = tpu.matmul %154, %155, %cst_47 {dimension_numbers = #tpu.dot_dimension_numbers<[1], [0], [0], [1], [0, 0, 1, 1], [], []>} : vector<16x128xbf16>, vector<128x32xbf16>, vector<16x32xf32> -> vector<16x32xf32>
    %c0_48 = arith.constant 0 : index
    %c0_49 = arith.constant 0 : index
    %157 = vector.load %arg5[%c0_48, %c0_49] : memref<1x32xf32, #tpu.memory_space<vmem>>, vector<1x32xf32>
    %158 = vector.broadcast %157 : vector<1x32xf32> to vector<16x32xf32>
    %159 = arith.addf %156, %158 : vector<16x32xf32>
    %c0_50 = arith.constant 0 : index
    %c0_51 = arith.constant 0 : index
    %160 = vector.load %arg14[%c0_50, %c0_51] : memref<16x32xf32, #tpu.memory_space<vmem>>, vector<16x32xf32>
    tpu.vector_store %arg14[%c0_50, %c0_51], %159 {strides = array<i32>} : memref<16x32xf32, #tpu.memory_space<vmem>>, vector<16x32xf32>,
    %c0_52 = arith.constant 0 : index
    %c0_53 = arith.constant 0 : index
    %161 = tpu.strided_load %arg14[%c0_52, %c0_53] {strides = array<i32: 4, 1>} : memref<16x32xf32, #tpu.memory_space<vmem>>, vector<4x32xf32>
    %c1 = arith.constant 1 : index
    %c0_54 = arith.constant 0 : index
    %162 = tpu.strided_load %arg14[%c1, %c0_54] {strides = array<i32: 4, 1>} : memref<16x32xf32, #tpu.memory_space<vmem>>, vector<4x32xf32>
    %c2 = arith.constant 2 : index
    %c0_55 = arith.constant 0 : index
    %163 = tpu.strided_load %arg14[%c2, %c0_55] {strides = array<i32: 4, 1>} : memref<16x32xf32, #tpu.memory_space<vmem>>, vector<4x32xf32>
    %c3 = arith.constant 3 : index
    %c0_56 = arith.constant 0 : index
    %164 = tpu.strided_load %arg14[%c3, %c0_56] {strides = array<i32: 4, 1>} : memref<16x32xf32, #tpu.memory_space<vmem>>, vector<4x32xf32>
    %165 = tpu.concatenate %161, %162, %163, %164 in 1 : vector<4x32xf32>, vector<4x32xf32>, vector<4x32xf32>, vector<4x32xf32> -> vector<4x128xf32>
    %c0_57 = arith.constant 0 : index
    %c0_58 = arith.constant 0 : index
    %166 = vector.load %arg13[%c0_57, %c0_58] : memref<4x128xf32, #tpu.memory_space<vmem>>, vector<4x128xf32>
    tpu.vector_store %arg13[%c0_57, %c0_58], %165 {strides = array<i32>} : memref<4x128xf32, #tpu.memory_space<vmem>>, vector<4x128xf32>,
    return
  }
  func.func @transform_0(%arg0: i32) -> (i32, i32) {
    %c0_i32 = arith.constant 0 : i32
    %c0_i32_0 = arith.constant 0 : i32
    return %arg0, %c0_i32 : i32, i32
  }
  func.func @transform_1(%arg0: i32) -> (i32, i32) {
    %c0_i32 = arith.constant 0 : i32
    %c0_i32_0 = arith.constant 0 : i32
    %c0_i32_1 = arith.constant 0 : i32
    return %c0_i32, %c0_i32_0 : i32, i32
  }
  func.func @transform_2(%arg0: i32) -> (i32, i32) {
    %c0_i32 = arith.constant 0 : i32
    %c0_i32_0 = arith.constant 0 : i32
    %c0_i32_1 = arith.constant 0 : i32
    return %c0_i32, %c0_i32_0 : i32, i32
  }
  func.func @transform_3(%arg0: i32) -> (i32, i32) {
    %c0_i32 = arith.constant 0 : i32
    %c0_i32_0 = arith.constant 0 : i32
    %c0_i32_1 = arith.constant 0 : i32
    return %c0_i32, %c0_i32_0 : i32, i32
  }
  func.func @transform_4(%arg0: i32) -> (i32, i32) {
    %c0_i32 = arith.constant 0 : i32
    %c0_i32_0 = arith.constant 0 : i32
    %c0_i32_1 = arith.constant 0 : i32
    return %c0_i32, %c0_i32_0 : i32, i32
  }
  func.func @transform_5(%arg0: i32) -> (i32, i32) {
    %c0_i32 = arith.constant 0 : i32
    %c0_i32_0 = arith.constant 0 : i32
    %c0_i32_1 = arith.constant 0 : i32
    return %c0_i32, %c0_i32_0 : i32, i32
  }
  func.func @transform_6(%arg0: i32) -> (i32, i32) {
    %c0_i32 = arith.constant 0 : i32
    %c0_i32_0 = arith.constant 0 : i32
    %c0_i32_1 = arith.constant 0 : i32
    return %c0_i32, %c0_i32_0 : i32, i32
  }
  func.func @transform_7(%arg0: i32) -> (i32, i32) {
    %c0_i32 = arith.constant 0 : i32
    %c0_i32_0 = arith.constant 0 : i32
    %c0_i32_1 = arith.constant 0 : i32
    return %c0_i32, %c0_i32_0 : i32, i32
  }
  func.func @transform_8(%arg0: i32) -> (i32, i32) {
    %c0_i32 = arith.constant 0 : i32
    %c0_i32_0 = arith.constant 0 : i32
    %c0_i32_1 = arith.constant 0 : i32
    return %c0_i32, %c0_i32_0 : i32, i32
  }
  func.func @transform_9(%arg0: i32) -> (i32, i32) {
    %c0_i32 = arith.constant 0 : i32
    %c0_i32_0 = arith.constant 0 : i32
    %c0_i32_1 = arith.constant 0 : i32
    return %c0_i32, %c0_i32_0 : i32, i32
  }
  func.func @transform_10(%arg0: i32) -> (i32, i32) {
    %c0_i32 = arith.constant 0 : i32
    %c0_i32_0 = arith.constant 0 : i32
    %c0_i32_1 = arith.constant 0 : i32
    return %c0_i32, %c0_i32_0 : i32, i32
  }
  func.func @transform_11(%arg0: i32) -> (i32, i32) {
    %c0_i32 = arith.constant 0 : i32
    %c0_i32_0 = arith.constant 0 : i32
    %c0_i32_1 = arith.constant 0 : i32
    return %c0_i32, %c0_i32_0 : i32, i32
  }
  func.func @transform_12(%arg0: i32) -> (i32, i32) {
    %c0_i32 = arith.constant 0 : i32
    %c0_i32_0 = arith.constant 0 : i32
    return %arg0, %c0_i32 : i32, i32
  }
}

</mosaic_0001>

<llo_original>
// kernel: tpu_custom_call.1
$region0: #{tpu_custom_call.1}
  #allocation0 [shape = 'u32[]', space=smem, size = 0x4, offset = 0x4, fixed_abs, tag = 'smem constant byte address 0x4 - core index']
  #allocation1 [shape = 'u32[72,128]{1,0:T(1,128)}', space=vmem, size = 0x9000, scoped, tag = 'internal scratch']
  #allocation2 [shape = 'f32[16,32]{1,0:T(8,128)}', space=vmem, size = 0x2000, scoped, tag = 'scratch operand']
  %s0 = inlined_call_operand.vmem [shape: f32[16,96], index: 0, kind: input, shape index: {}]
  %s1 = inlined_call_operand.vmem [shape: bf16[96,96], index: 1, kind: input, shape index: {}]
  %s2 = inlined_call_operand.hbm [shape: f32[1,96], index: 2, kind: input, shape index: {}]
  %s3 = inlined_call_operand.vmem [shape: bf16[128,32], index: 3, kind: input, shape index: {}]
  %s4 = inlined_call_operand.hbm [shape: f32[1,32], index: 4, kind: input, shape index: {}]
  %s5 = inlined_call_operand.vmem [shape: bf16[32,32], index: 5, kind: input, shape index: {}]
  %s6 = inlined_call_operand.hbm [shape: bf16[32,32], index: 6, kind: input, shape index: {}]
  %s7 = inlined_call_operand.hbm [shape: bf16[32,32], index: 7, kind: input, shape index: {}]
  %s8 = inlined_call_operand.hbm [shape: f32[3,32], index: 8, kind: input, shape index: {}]
  %s9 = inlined_call_operand.hbm [shape: f32[1,32], index: 9, kind: input, shape index: {}]
  %s10 = inlined_call_operand.vmem [shape: f32[5,32], index: 10, kind: input, shape index: {}]
  %s11 = inlined_call_operand.vmem [shape: f32[1,32], index: 11, kind: input, shape index: {}]
  %s12 = inlined_call_operand.hbm [shape: f32[4,128], index: 12, kind: output, shape index: {}]
  %s13 = sld [smem:[#allocation0]]
  $region82: #{tpu_custom_call.1} parent=0
    _
  %s15 = ssub.s32 1, %s13
  %s16 = scalar_select 0, %s15, %s13
  $region1: #{tpu_custom_call.1} parent=0
    #allocation3 [shape = 'u8[512]{0}', space=vmem, size = 0x400, scoped, tag = 'input window, operand 2, single buffered']
    #allocation4 [shape = 's32[1]{0}', space=sflag, size = 0x4, scoped, tag = 'scoped memory for tpu_custom_call.1']
    #allocation5 [shape = 's32[1]{0}', space=sflag, size = 0x4, scoped, tag = 'scoped memory for tpu_custom_call.1']
    #allocation6 [shape = 'u8[512]{0}', space=vmem, size = 0x400, scoped, tag = 'input window, operand 4, single buffered']
    #allocation7 [shape = 's32[1]{0}', space=sflag, size = 0x4, scoped, tag = 'scoped memory for tpu_custom_call.1']
    #allocation8 [shape = 'u8[8192]{0}', space=vmem, size = 0x2000, scoped, tag = 'input window, operand 6, single buffered']
    #allocation9 [shape = 'u8[8192]{0}', space=vmem, size = 0x2000, scoped, tag = 'input window, operand 7, single buffered']
    #allocation10 [shape = 's32[1]{0}', space=sflag, size = 0x4, scoped, tag = 'scoped memory for tpu_custom_call.1']
    #allocation11 [shape = 'u8[2048]{0}', space=vmem, size = 0x800, scoped, tag = 'input window, operand 8, single buffered']
    #allocation12 [shape = 'u8[512]{0}', space=vmem, size = 0x400, scoped, tag = 'input window, operand 9, single buffered']
    #allocation13 [shape = 's32[1]{0}', space=sflag, size = 0x4, scoped, tag = 'scoped memory for tpu_custom_call.1']
    #allocation14 [shape = 'u8[2048]{0}', space=vmem, size = 0x800, scoped, tag = 'output window, operand 0, single buffered']
    %17 = vsyncpa [#allocation4], 0
    %18 = vsyncpa [#allocation7], 0
    %19 = vsyncpa [#allocation10], 0
    %20 = vsyncpa [#allocation13], 0
    %21 = vsyncpa [#allocation5], 0
    // Predicated region
    $region2: #{tpu_custom_call.1} parent=1 // pred_check
      _
    $region3: #{tpu_custom_call.1} parent=1 // pred_check_branch
      %23 = sbr.rel (0) target = $region5
    $region4: #{tpu_custom_call.1} parent=1 // pred_region
      _
    $region5: #{tpu_custom_call.1} parent=1 // pred_fallthru
      _
    // Predicated region
    $region6: #{tpu_custom_call.1} parent=1 // pred_check
      _
    $region7: #{tpu_custom_call.1} parent=1 // pred_check_branch
      %25 = sbr.rel (0) target = $region9
    $region8: #{tpu_custom_call.1} parent=1 // pred_region
      _
    $region9: #{tpu_custom_call.1} parent=1 // pred_fallthru
      _
    // Predicated region
    $region10: #{tpu_custom_call.1} parent=1 // pred_check
      _
    $region11: #{tpu_custom_call.1} parent=1 // pred_check_branch
      %27 = sbr.rel (0) target = $region13
    $region12: #{tpu_custom_call.1} parent=1 // pred_region
      %29 = vsyncadd [#allocation4], 0
      %s31 = sshll.u32 %s2, 4
      %s32 = int_to_ptr.hbm [resolvable:$true] %s31
      %s33 = sshll.u32 [#allocation3], 4
      %s34 = int_to_ptr.vmem [resolvable:$true] %s33
      %36 = dma.hbm_to_vmem [thread:$0]  %s32, 16, %s34, [#allocation4]
    $region13: #{tpu_custom_call.1} parent=1 // pred_fallthru
      _
    // Predicated region
    $region14: #{tpu_custom_call.1} parent=1 // pred_check
      _
    $region15: #{tpu_custom_call.1} parent=1 // pred_check_branch
      %38 = sbr.rel (0) target = $region17
    $region16: #{tpu_custom_call.1} parent=1 // pred_region
      _
    $region17: #{tpu_custom_call.1} parent=1 // pred_fallthru
      _
    // Predicated region
    $region18: #{tpu_custom_call.1} parent=1 // pred_check
      _
    $region19: #{tpu_custom_call.1} parent=1 // pred_check_branch
      %40 = sbr.rel (0) target = $region21
    $region20: #{tpu_custom_call.1} parent=1 // pred_region
      %42 = vsyncadd [#allocation7], 0
      %s44 = sshll.u32 %s4, 4
      %s45 = int_to_ptr.hbm [resolvable:$true] %s44
      %s46 = sshll.u32 [#allocation6], 4
      %s47 = int_to_ptr.vmem [resolvable:$true] %s46
      %49 = dma.hbm_to_vmem [thread:$0]  %s45, 16, %s47, [#allocation7]
    $region21: #{tpu_custom_call.1} parent=1 // pred_fallthru
      _
    // Predicated region
    $region22: #{tpu_custom_call.1} parent=1 // pred_check
      _
    $region23: #{tpu_custom_call.1} parent=1 // pred_check_branch
      %51 = sbr.rel (0) target = $region25
    $region24: #{tpu_custom_call.1} parent=1 // pred_region
      _
    $region25: #{tpu_custom_call.1} parent=1 // pred_fallthru
      _
    // Predicated region
    $region26: #{tpu_custom_call.1} parent=1 // pred_check
      _
    $region27: #{tpu_custom_call.1} parent=1 // pred_check_branch
      %53 = sbr.rel (0) target = $region29
    $region28: #{tpu_custom_call.1} parent=1 // pred_region
      %55 = vsyncadd [#allocation7], 0
      %s56 = sshll.u32 %s6, 4
      %s57 = int_to_ptr.hbm [resolvable:$true] %s56
      %s58 = sshll.u32 [#allocation8], 4
      %s59 = int_to_ptr.vmem [resolvable:$true] %s58
      %64 = dma.hbm_to_vmem [thread:$0]  %s57, 256, %s59, [#allocation7], 64, 64, 4
    $region29: #{tpu_custom_call.1} parent=1 // pred_fallthru
      _
    // Predicated region
    $region30: #{tpu_custom_call.1} parent=1 // pred_check
      _
    $region31: #{tpu_custom_call.1} parent=1 // pred_check_branch
      %66 = sbr.rel (0) target = $region33
    $region32: #{tpu_custom_call.1} parent=1 // pred_region
      %68 = vsyncadd [#allocation10], 0
      %s69 = sshll.u32 %s7, 4
      %s70 = int_to_ptr.hbm [resolvable:$true] %s69
      %s71 = sshll.u32 [#allocation9], 4
      %s72 = int_to_ptr.vmem [resolvable:$true] %s71
      %77 = dma.hbm_to_vmem [thread:$0]  %s70, 256, %s72, [#allocation10], 64, 64, 4
    $region33: #{tpu_custom_call.1} parent=1 // pred_fallthru
      _
    // Predicated region
    $region34: #{tpu_custom_call.1} parent=1 // pred_check
      _
    $region35: #{tpu_custom_call.1} parent=1 // pred_check_branch
      %79 = sbr.rel (0) target = $region37
    $region36: #{tpu_custom_call.1} parent=1 // pred_region
      %81 = vsyncadd [#allocation10], 0
      %s83 = sshll.u32 %s8, 4
      %s84 = int_to_ptr.hbm [resolvable:$true] %s83
      %s85 = sshll.u32 [#allocation11], 4
      %s86 = int_to_ptr.vmem [resolvable:$true] %s85
      %88 = dma.hbm_to_vmem [thread:$0]  %s84, 64, %s86, [#allocation10]
    $region37: #{tpu_custom_call.1} parent=1 // pred_fallthru
      _
    // Predicated region
    $region38: #{tpu_custom_call.1} parent=1 // pred_check
      _
    $region39: #{tpu_custom_call.1} parent=1 // pred_check_branch
      %90 = sbr.rel (0) target = $region41
    $region40: #{tpu_custom_call.1} parent=1 // pred_region
      %92 = vsyncadd [#allocation13], 0
      %s94 = sshll.u32 %s9, 4
      %s95 = int_to_ptr.hbm [resolvable:$true] %s94
      %s96 = sshll.u32 [#allocation12], 4
      %s97 = int_to_ptr.vmem [resolvable:$true] %s96
      %99 = dma.hbm_to_vmem [thread:$0]  %s95, 16, %s97, [#allocation13]
    $region41: #{tpu_custom_call.1} parent=1 // pred_fallthru
      _
    // Predicated region
    $region42: #{tpu_custom_call.1} parent=1 // pred_check
      _
    $region43: #{tpu_custom_call.1} parent=1 // pred_check_branch
      %101 = sbr.rel (0) target = $region45
    $region44: #{tpu_custom_call.1} parent=1 // pred_region
      _
    $region45: #{tpu_custom_call.1} parent=1 // pred_fallthru
      _
    // Predicated region
    $region46: #{tpu_custom_call.1} parent=1 // pred_check
      _
    $region47: #{tpu_custom_call.1} parent=1 // pred_check_branch
      %103 = sbr.rel (0) target = $region49
    $region48: #{tpu_custom_call.1} parent=1 // pred_region
      _
    $region49: #{tpu_custom_call.1} parent=1 // pred_fallthru
      _
    // Predicated region
    $region50: #{tpu_custom_call.1} parent=1 // pred_check
      _
    $region51: #{tpu_custom_call.1} parent=1 // pred_check_branch
      %105 = sbr.rel (0) target = $region53
    $region52: #{tpu_custom_call.1} parent=1 // pred_region
      %107 = dma.done [#allocation4], 16
    $region53: #{tpu_custom_call.1} parent=1 // pred_fallthru
      _
    // Predicated region
    $region54: #{tpu_custom_call.1} parent=1 // pred_check
      _
    $region55: #{tpu_custom_call.1} parent=1 // pred_check_branch
      %109 = sbr.rel (0) target = $region57
    $region56: #{tpu_custom_call.1} parent=1 // pred_region
      %111 = dma.done [#allocation7], 16
    $region57: #{tpu_custom_call.1} parent=1 // pred_fallthru
      _
    // Predicated region
    $region58: #{tpu_custom_call.1} parent=1 // pred_check
      _
    $region59: #{tpu_custom_call.1} parent=1 // pred_check_branch
      %113 = sbr.rel (0) target = $region61
    $region60: #{tpu_custom_call.1} parent=1 // pred_region
      %115 = dma.done [#allocation7], 256
    $region61: #{tpu_custom_call.1} parent=1 // pred_fallthru
      _
    // Predicated region
    $region62: #{tpu_custom_call.1} parent=1 // pred_check
      _
    $region63: #{tpu_custom_call.1} parent=1 // pred_check_branch
      %117 = sbr.rel (0) target = $region65
    $region64: #{tpu_custom_call.1} parent=1 // pred_region
      %119 = dma.done [#allocation10], 256
    $region65: #{tpu_custom_call.1} parent=1 // pred_fallthru
      _
    // Predicated region
    $region66: #{tpu_custom_call.1} parent=1 // pred_check
      _
    $region67: #{tpu_custom_call.1} parent=1 // pred_check_branch
      %121 = sbr.rel (0) target = $region69
    $region68: #{tpu_custom_call.1} parent=1 // pred_region
      %123 = dma.done [#allocation10], 64
    $region69: #{tpu_custom_call.1} parent=1 // pred_fallthru
      _
    // Predicated region
    $region70: #{tpu_custom_call.1} parent=1 // pred_check
      _
    $region71: #{tpu_custom_call.1} parent=1 // pred_check_branch
      %125 = sbr.rel (0) target = $region73
    $region72: #{tpu_custom_call.1} parent=1 // pred_region
      %127 = dma.done [#allocation13], 16
    $region73: #{tpu_custom_call.1} parent=1 // pred_fallthru
      _
    %v129 = vld [vmem:[%s0] sm:$0xff]
    %v130 = vld [vmem:[%s0 + $0x8] sm:$0xff]
    %v131 = vpack.c.bf16 %v130, %v129
    %v132 = vld [vmem:[%s1] sm:$0xf]
    %v133 = vld [vmem:[%s1 + $0x4] sm:$0xf]
    %v134 = vld [vmem:[%s1 + $0x8] sm:$0xf]
    %v135 = vld [vmem:[%s1 + $0xc] sm:$0xf]
    %v136 = vld [vmem:[%s1 + $0x10] sm:$0xf]
    %v137 = vld [vmem:[%s1 + $0x14] sm:$0xf]
    %v138 = vld [vmem:[%s1 + $0x18] sm:$0xf]
    %v139 = vld [vmem:[%s1 + $0x1c] sm:$0xf]
    %v140 = vld [vmem:[%s1 + $0x20] sm:$0xf]
    %v141 = vld [vmem:[%s1 + $0x24] sm:$0xf]
    %v142 = vld [vmem:[%s1 + $0x28] sm:$0xf]
    %v143 = vld [vmem:[%s1 + $0x2c] sm:$0xf]
    %v144 = vld [vmem:[#allocation3] sm:$0x1]
    %v146 = vperm.slane %v144, 0
    %v160 = vunpack.c.l.b16 %v132
    %v161 = vunpack.c.l.b16 %v133
    %v162 = vunpack.c.l.b16 %v134
    %v163 = vunpack.c.l.b16 %v135
    %v164 = vunpack.c.l.b16 %v136
    %v165 = vunpack.c.l.b16 %v137
    %v166 = vunpack.c.l.b16 %v138
    %v167 = vunpack.c.l.b16 %v139
    %v168 = vunpack.c.l.b16 %v140
    %v169 = vunpack.c.l.b16 %v141
    %v170 = vunpack.c.l.b16 %v142
    %v171 = vunpack.c.l.b16 %v143
    %v172 = vpack.c.b16 %v161, %v160
    %v173 = vpack.c.b16 %v163, %v162
    %v174 = vpack.c.b16 %v165, %v164
    %v175 = vpack.c.b16 %v167, %v166
    %v176 = vpack.c.b16 %v169, %v168
    %v177 = vpack.c.b16 %v171, %v170
    %vm184 = vcmask 785408
    %v186 = vsel %vm184, %v131, 0
    %188 = vmatpush.bf16.msra.mxu0 0
    %189 = vmatpush.bf16.msra.mxu0 0
    %190 = vmatpush.bf16.msra.mxu0 %v177
    %191 = vmatpush.bf16.msra.mxu0 %v176
    %192 = vmatpush.bf16.msra.mxu0 %v175
    %193 = vmatpush.bf16.msra.mxu0 %v174
    %194 = vmatpush.bf16.msra.mxu0 %v173
    %195 = vmatpush.bf16.msra.mxu0 %v172
    %196 = vmatmul.bf16.gmra.mxu0 %v186
    %v197 = vpop.f32.mrf.mxu0
    %v198 = vadd.f32 %v146, %v197
    %v199 = vpop.f32.mrf.mxu0
    %v200 = vadd.f32 %v146, %v199
    %201 = vdwg.mxu0
    %v202 = vpack.c.bf16 %v198, %v198
    %v203 = vpack.c.bf16 %v200, %v200
    %v204 = vld [vmem:[%s5] sm:$0xf]
    %v205 = vld [vmem:[%s5 + $0x4] sm:$0xf]
    %v206 = vld [vmem:[%s5 + $0x8] sm:$0xf]
    %v207 = vld [vmem:[%s5 + $0xc] sm:$0xf]
    %v208 = vunpack.c.l.bf16 %v202
    %v209 = vunpack.c.l.bf16 %v203
    %v210 = vunpack.c.l.bf16 %v204
    %v211 = vunpack.c.l.bf16 %v205
    %v212 = vunpack.c.l.bf16 %v206
    %v213 = vunpack.c.l.bf16 %v207
    %218 = vrot.lane.b32.xlu0 %v210, 32
    %v219 = vpop.permute.xlu0 %218
    %220 = vrot.lane.b32.xlu0 %v211, 32
    %v221 = vpop.permute.xlu0 %220
    %222 = vrot.lane.b32.xlu0 %v212, 32
    %v223 = vpop.permute.xlu0 %222
    %224 = vrot.lane.b32.xlu0 %v213, 32
    %v225 = vpop.permute.xlu0 %224
    %v230 = vmul.f32 %v208, %v219
    %v231 = vmul.f32 %v208, %v221
    %v232 = vmul.f32 %v208, %v223
    %v233 = vmul.f32 %v208, %v225
    %v234 = vmul.f32 %v209, %v219
    %v235 = vmul.f32 %v209, %v221
    %v236 = vmul.f32 %v209, %v223
    %v237 = vmul.f32 %v209, %v225
    %v238 = vpack.c.bf16 %v230, %v230
    %v239 = vpack.c.bf16 %v231, %v231
    %v240 = vpack.c.bf16 %v232, %v232
    %v241 = vpack.c.bf16 %v233, %v233
    %v242 = vpack.c.bf16 %v234, %v234
    %v243 = vpack.c.bf16 %v235, %v235
    %v244 = vpack.c.bf16 %v236, %v236
    %v245 = vpack.c.bf16 %v237, %v237
    %v250 = vunpack.c.l.b16 %v238
    %v251 = vunpack.c.l.b16 %v239
    %v252 = vunpack.c.l.b16 %v240
    %v253 = vunpack.c.l.b16 %v241
    %v254 = vpack.c.b16 %v251, %v250
    %v255 = vpack.c.b16 %v253, %v252
    %256 = vrot.lane.b32.xlu0 %v254, 96
    %v257 = vpop.permute.xlu0 %256
    %258 = vrot.lane.b32.xlu0 %v255, 96
    %v259 = vpop.permute.xlu0 %258
    %vm260 = vcmask 261120
    %v262 = vsel %vm260, %v202, 0
    %v265 = vsel %vm260, %v257, 0
    %v268 = vsel %vm260, %v259, 0
    %270 = vmatpush.bf16.xpose.msra.mxu0 0
    %271 = vmatpush.bf16.xpose.msra.mxu0 0
    %272 = vmatpush.bf16.xpose.msra.mxu0 0
    %273 = vmatpush.bf16.xpose.msra.mxu0 0
    %274 = vmatpush.bf16.xpose.msra.mxu0 0
    %275 = vmatpush.bf16.xpose.msra.mxu0 0
    %276 = vmatpush.bf16.xpose.msra.mxu0 %v268
    %277 = vmatpush.bf16.xpose.msra.mxu0 %v265
    %278 = vmatmul.bf16.gmra.mxu0 %v262
    %v279 = vpop.f32.mrf.mxu0
    %v280 = vadd.f32 0.0, %v279
    %v281 = vpop.f32.mrf.mxu0
    %282 = vdwg.mxu0
    %v287 = vunpack.c.l.b16 %v242
    %v288 = vunpack.c.l.b16 %v243
    %v289 = vunpack.c.l.b16 %v244
    %v290 = vunpack.c.l.b16 %v245
    %v291 = vpack.c.b16 %v288, %v287
    %v292 = vpack.c.b16 %v290, %v289
    %293 = vrot.lane.b32.xlu0 %v291, 96
    %v294 = vpop.permute.xlu0 %293
    %295 = vrot.lane.b32.xlu0 %v292, 96
    %v296 = vpop.permute.xlu0 %295
    %v298 = vsel %vm260, %v203, 0
    %v301 = vsel %vm260, %v294, 0
    %v304 = vsel %vm260, %v296, 0
    %306 = vmatpush.bf16.xpose.msra.mxu0 0
    %307 = vmatpush.bf16.xpose.msra.mxu0 0
    %308 = vmatpush.bf16.xpose.msra.mxu0 0
    %309 = vmatpush.bf16.xpose.msra.mxu0 0
    %310 = vmatpush.bf16.xpose.msra.mxu0 0
    %311 = vmatpush.bf16.xpose.msra.mxu0 0
    %312 = vmatpush.bf16.xpose.msra.mxu0 %v304
    %313 = vmatpush.bf16.xpose.msra.mxu0 %v301
    %314 = vmatmul.bf16.gmra.mxu0 %v298
    %v315 = vpop.f32.mrf.mxu0
    %v316 = vadd.f32 0.0, %v315
    %v317 = vpop.f32.mrf.mxu0
    %318 = vdwg.mxu0
    %v319 = vsel %vm260, %v280, -inf
    %320 = vmax.xlane.f32.xlu0 %v319
    %v321 = vpop.xlane.xlu0 %320
    %v322 = vsel %vm260, %v316, -inf
    %323 = vmax.xlane.f32.xlu0 %v322
    %v324 = vpop.xlane.xlu0 %323
    %v325 = vsub.f32 %v280, %v321
    %v326 = vsub.f32 %v316, %v324
    %v327 = vmul.f32 %v325, 1.442695
    %v328 = vpow.pop %v327
    %v329 = vmul.f32 %v326, 1.442695
    %v330 = vpow.pop %v329
    %v331 = vpack.c.bf16 %v330, %v328
    %v332 = vld [vmem:[#allocation9] sm:$0xf]
    %v333 = vld [vmem:[#allocation9 + $0x4] sm:$0xf]
    %v334 = vld [vmem:[#allocation9 + $0x8] sm:$0xf]
    %v335 = vld [vmem:[#allocation9 + $0xc] sm:$0xf]
    %v340 = vunpack.c.l.b16 %v332
    %v341 = vunpack.c.l.b16 %v333
    %v342 = vunpack.c.l.b16 %v334
    %v343 = vunpack.c.l.b16 %v335
    %v344 = vpack.c.b16 %v341, %v340
    %v345 = vpack.c.b16 %v343, %v342
    %v349 = vsel %vm260, %v331, 0
    %351 = vmatpush.bf16.msra.mxu0 0
    %352 = vmatpush.bf16.msra.mxu0 0
    %353 = vmatpush.bf16.msra.mxu0 0
    %354 = vmatpush.bf16.msra.mxu0 0
    %355 = vmatpush.bf16.msra.mxu0 0
    %356 = vmatpush.bf16.msra.mxu0 0
    %357 = vmatpush.bf16.msra.mxu0 %v345
    %358 = vmatpush.bf16.msra.mxu0 %v344
    %359 = vmatmul.bf16.gmra.mxu0 %v349
    %v360 = vpop.f32.mrf.mxu0
    %v361 = vadd.f32 0.0, %v360
    %v362 = vpop.f32.mrf.mxu0
    %v363 = vadd.f32 0.0, %v362
    %364 = vdwg.mxu0
    %v365 = vrcp.pop %v361
    %v366 = vrcp.pop %v363
    %v367 = vmul.f32 %v328, %v365
    %v368 = vmul.f32 %v330, %v366
    %v369 = vpack.c.bf16 %v367, %v367
    %v370 = vpack.c.bf16 %v368, %v368
    %v371 = vld [vmem:[#allocation8] sm:$0xf]
    %v372 = vld [vmem:[#allocation8 + $0x4] sm:$0xf]
    %v373 = vld [vmem:[#allocation8 + $0x8] sm:$0xf]
    %v374 = vld [vmem:[#allocation8 + $0xc] sm:$0xf]
    %v375 = vunpack.c.l.bf16 %v371
    %v376 = vunpack.c.l.bf16 %v372
    %v377 = vunpack.c.l.bf16 %v373
    %v378 = vunpack.c.l.bf16 %v374
    %383 = vrot.lane.b32.xlu0 %v375, 64
    %v384 = vpop.permute.xlu0 %383
    %385 = vrot.lane.b32.xlu0 %v376, 64
    %v386 = vpop.permute.xlu0 %385
    %387 = vrot.lane.b32.xlu0 %v377, 64
    %v388 = vpop.permute.xlu0 %387
    %389 = vrot.lane.b32.xlu0 %v378, 64
    %v390 = vpop.permute.xlu0 %389
    %v395 = vmul.f32 %v208, %v384
    %v396 = vmul.f32 %v208, %v386
    %v397 = vmul.f32 %v208, %v388
    %v398 = vmul.f32 %v208, %v390
    %v399 = vmul.f32 %v209, %v384
    %v400 = vmul.f32 %v209, %v386
    %v401 = vmul.f32 %v209, %v388
    %v402 = vmul.f32 %v209, %v390
    %v403 = vpack.c.bf16 %v395, %v395
    %v404 = vpack.c.bf16 %v396, %v396
    %v405 = vpack.c.bf16 %v397, %v397
    %v406 = vpack.c.bf16 %v398, %v398
    %v407 = vpack.c.bf16 %v399, %v399
    %v408 = vpack.c.bf16 %v400, %v400
    %v409 = vpack.c.bf16 %v401, %v401
    %v410 = vpack.c.bf16 %v402, %v402
    %v415 = vunpack.c.l.b16 %v403
    %v416 = vunpack.c.l.b16 %v404
    %v417 = vunpack.c.l.b16 %v405
    %v418 = vunpack.c.l.b16 %v406
    %v419 = vpack.c.b16 %v416, %v415
    %v420 = vpack.c.b16 %v418, %v417
    %421 = vrot.lane.b32.xlu0 %v419, 64
    %v422 = vpop.permute.xlu0 %421
    %423 = vrot.lane.b32.xlu0 %v420, 64
    %v424 = vpop.permute.xlu0 %423
    %v428 = vsel %vm260, %v369, 0
    %430 = vmatpush.bf16.msra.mxu0 0
    %431 = vmatpush.bf16.msra.mxu0 0
    %432 = vmatpush.bf16.msra.mxu0 0
    %433 = vmatpush.bf16.msra.mxu0 0
    %434 = vmatpush.bf16.msra.mxu0 0
    %435 = vmatpush.bf16.msra.mxu0 0
    %436 = vmatpush.bf16.msra.mxu0 %v424
    %437 = vmatpush.bf16.msra.mxu0 %v422
    %438 = vmatmul.bf16.gmra.mxu0 %v428
    %v439 = vpop.f32.mrf.mxu0
    %v440 = vadd.f32 0.0, %v439
    %v441 = vpop.f32.mrf.mxu0
    %442 = vdwg.mxu0
    %v447 = vunpack.c.l.b16 %v407
    %v448 = vunpack.c.l.b16 %v408
    %v449 = vunpack.c.l.b16 %v409
    %v450 = vunpack.c.l.b16 %v410
    %v451 = vpack.c.b16 %v448, %v447
    %v452 = vpack.c.b16 %v450, %v449
    %453 = vrot.lane.b32.xlu0 %v451, 64
    %v454 = vpop.permute.xlu0 %453
    %455 = vrot.lane.b32.xlu0 %v452, 64
    %v456 = vpop.permute.xlu0 %455
    %v460 = vsel %vm260, %v370, 0
    %462 = vmatpush.bf16.msra.mxu0 0
    %463 = vmatpush.bf16.msra.mxu0 0
    %464 = vmatpush.bf16.msra.mxu0 0
    %465 = vmatpush.bf16.msra.mxu0 0
    %466 = vmatpush.bf16.msra.mxu0 0
    %467 = vmatpush.bf16.msra.mxu0 0
    %468 = vmatpush.bf16.msra.mxu0 %v456
    %469 = vmatpush.bf16.msra.mxu0 %v454
    %470 = vmatmul.bf16.gmra.mxu0 %v460
    %v471 = vpop.f32.mrf.mxu0
    %v472 = vadd.f32 0.0, %v471
    %v473 = vpop.f32.mrf.mxu0
    %474 = vdwg.mxu0
    %v475 = vlaneseq
    %v476 = vshrl.u32 %v475, 7
    %v477 = vadd.s32 %v476, 8
    %vm478 = vcmp.lt.s32.totalorder %v476, 0
    %v479 = vsub.s32 0, %v476
    %v480 = vsel %vm478, %v479, %v476
    %v481 = vshrl.u32 %v480, 3
    %v482 = vand.u32 %v480, 7
    %v483 = vsub.s32 0, %v482
    %v484 = vsel %vm478, %v483, %v482
    %vm485 = vcmp.lt.s32.totalorder %v477, 0
    %v486 = vsub.s32 0, %v477
    %v487 = vsel %vm485, %v486, %v477
    %v488 = vshrl.u32 %v487, 3
    %v489 = vand.u32 %v487, 7
    %v490 = vsub.s32 0, %v489
    %v491 = vsel %vm485, %v490, %v489
    %vm492 = vcmp.ne.s32.totalorder %v484, 0
    %vm493 = vcmp.ne.s32.totalorder %v491, 0
    %vm494 = vcmp.lt.s32.totalorder %v484, 0
    %vm495 = vcmp.lt.s32.totalorder %v491, 0
    %vm496 = vmand %vm494, %vm492
    %vm497 = vmand %vm495, %vm493
    %v498 = vadd.s32 %v484, 8
    %v499 = vadd.s32 %v491, 8
    %v500 = vsel %vm496, %v498, %v484
    %v501 = vsel %vm497, %v499, %v491
    %504 = vrot.lane.b32.xlu0 %v198, 64
    %v505 = vpop.permute.xlu0 %504
    %506 = vrot.lane.b32.xlu0 %v200, 64
    %v507 = vpop.permute.xlu0 %506
    %v510 = vrot.slane %v505, 6
    %v511 = vrot.slane %v507, 6
    %vm512 = vcmp.lt.s32.totalorder %v476, 2
    %v513 = vsel %vm512, %v510, %v511
    %v514 = vsel %vm512, %v511, %v510
    %v515 = vadd.s32 %v500, 4294967294
    %v516 = vadd.s32 %v501, 4294967294
    %vm517 = vcmp.ge.s32.totalorder %v515, 0
    %vm518 = vcmp.ge.s32.totalorder %v516, 0
    %vm519 = vcmp.lt.s32.totalorder %v515, 8
    %vm520 = vcmp.lt.s32.totalorder %v516, 8
    %vm521 = vmand %vm517, %vm519
    %vm522 = vmand %vm518, %vm520
    %v523 = vsel %vm521, 1, 0
    %v524 = vsel %vm522, 1, 0
    %vm525 = vcmp.eq.s32.totalorder %v523, 1
    %vm526 = vcmp.eq.s32.totalorder %v524, 1
    %v527 = vsel %vm525, %v514, 0.0
    %v528 = vsel %vm526, %v513, 0.0
    %v529 = vrot.slane %v505, 7
    %v530 = vrot.slane %v507, 7
    %vm531 = vcmp.lt.s32.totalorder %v476, 1
    %v532 = vsel %vm531, %v529, %v530
    %v533 = vsel %vm531, %v530, %v529
    %v534 = vadd.s32 %v500, 4294967295
    %v535 = vadd.s32 %v501, 4294967295
    %vm536 = vcmp.ge.s32.totalorder %v534, 0
    %vm537 = vcmp.ge.s32.totalorder %v535, 0
    %vm538 = vcmp.lt.s32.totalorder %v534, 8
    %vm539 = vcmp.lt.s32.totalorder %v535, 8
    %vm540 = vmand %vm536, %vm538
    %vm541 = vmand %vm537, %vm539
    %v542 = vsel %vm540, 1, 0
    %v543 = vsel %vm541, 1, 0
    %vm544 = vcmp.eq.s32.totalorder %v542, 1
    %vm545 = vcmp.eq.s32.totalorder %v543, 1
    %v546 = vsel %vm544, %v533, 0.0
    %v547 = vsel %vm545, %v532, 0.0
    %v548 = vrot.slane %v505, 1
    %v549 = vrot.slane %v507, 1
    %vm550 = vcmp.lt.s32.totalorder %v476, 7
    %v551 = vsel %vm550, %v548, %v549
    %v552 = vsel %vm550, %v549, %v548
    %v553 = vadd.s32 %v500, 1
    %v554 = vadd.s32 %v501, 1
    %vm555 = vcmp.ge.s32.totalorder %v553, 0
    %vm556 = vcmp.ge.s32.totalorder %v554, 0
    %vm557 = vcmp.lt.s32.totalorder %v553, 8
    %vm558 = vcmp.lt.s32.totalorder %v554, 8
    %vm559 = vmand %vm555, %vm557
    %vm560 = vmand %vm556, %vm558
    %v561 = vsel %vm559, 1, 0
    %v562 = vsel %vm560, 1, 0
    %vm563 = vcmp.eq.s32.totalorder %v561, 1
    %vm564 = vcmp.eq.s32.totalorder %v562, 1
    %v565 = vsel %vm563, %v551, 0.0
    %v566 = vsel %vm564, %v552, 0.0
    %v567 = vrot.slane %v505, 2
    %v568 = vrot.slane %v507, 2
    %vm569 = vcmp.lt.s32.totalorder %v476, 6
    %v570 = vsel %vm569, %v567, %v568
    %v571 = vsel %vm569, %v568, %v567
    %v572 = vadd.s32 %v500, 2
    %v573 = vadd.s32 %v501, 2
    %vm574 = vcmp.ge.s32.totalorder %v572, 0
    %vm575 = vcmp.ge.s32.totalorder %v573, 0
    %vm576 = vcmp.lt.s32.totalorder %v572, 8
    %vm577 = vcmp.lt.s32.totalorder %v573, 8
    %vm578 = vmand %vm574, %vm576
    %vm579 = vmand %vm575, %vm577
    %v580 = vsel %vm578, 1, 0
    %v581 = vsel %vm579, 1, 0
    %vm582 = vcmp.eq.s32.totalorder %v580, 1
    %vm583 = vcmp.eq.s32.totalorder %v581, 1
    %v584 = vsel %vm582, %v570, 0.0
    %v585 = vsel %vm583, %v571, 0.0
    %v586 = vld [vmem:[#allocation11] sm:$0x7]
    %v587 = vld [vmem:[%s10] sm:$0x1f]
    %v588 = vperm.slane %v586, 0
    %v589 = vmul.f32 %v546, %v588
    %v590 = vmul.f32 %v547, %v588
    %v591 = vperm.slane %v586, 1
    %593 = vrot.lane.b32.xlu0 %v591, 64
    %v594 = vpop.permute.xlu0 %593
    %v596 = vmul.f32 %v198, %v594
    %v597 = vmul.f32 %v200, %v594
    %600 = vrot.lane.b32.xlu0 %v596, 64
    %v601 = vpop.permute.xlu0 %600
    %602 = vrot.lane.b32.xlu0 %v597, 64
    %v603 = vpop.permute.xlu0 %602
    %v606 = vadd.f32 %v589, %v601
    %v607 = vadd.f32 %v590, %v603
    %v608 = vperm.slane %v586, 2
    %v609 = vmul.f32 %v565, %v608
    %v610 = vmul.f32 %v566, %v608
    %v611 = vadd.f32 %v606, %v609
    %v612 = vadd.f32 %v607, %v610
    %v613 = vld [vmem:[#allocation12] sm:$0x1]
    %v615 = vperm.slane %v613, 0
    %v617 = vadd.f32 %v611, %v615
    %v618 = vadd.f32 %v612, %v615
    %v619 = vperm.slane %v587, 0
    %v620 = vmul.f32 %v527, %v619
    %v621 = vmul.f32 %v528, %v619
    %v622 = vperm.slane %v587, 1
    %v623 = vmul.f32 %v546, %v622
    %v624 = vmul.f32 %v547, %v622
    %v625 = vadd.f32 %v620, %v623
    %v626 = vadd.f32 %v621, %v624
    %v627 = vperm.slane %v587, 2
    %629 = vrot.lane.b32.xlu0 %v627, 64
    %v630 = vpop.permute.xlu0 %629
    %v632 = vmul.f32 %v198, %v630
    %v633 = vmul.f32 %v200, %v630
    %636 = vrot.lane.b32.xlu0 %v632, 64
    %v637 = vpop.permute.xlu0 %636
    %638 = vrot.lane.b32.xlu0 %v633, 64
    %v639 = vpop.permute.xlu0 %638
    %v642 = vadd.f32 %v625, %v637
    %v643 = vadd.f32 %v626, %v639
    %v644 = vperm.slane %v587, 3
    %v645 = vmul.f32 %v565, %v644
    %v646 = vmul.f32 %v566, %v644
    %v647 = vadd.f32 %v642, %v645
    %v648 = vadd.f32 %v643, %v646
    %v649 = vperm.slane %v587, 4
    %v650 = vmul.f32 %v584, %v649
    %v651 = vmul.f32 %v585, %v649
    %v652 = vadd.f32 %v647, %v650
    %v653 = vadd.f32 %v648, %v651
    %v654 = vld [vmem:[%s11] sm:$0x1]
    %v656 = vperm.slane %v654, 0
    %v658 = vadd.f32 %v652, %v656
    %v659 = vadd.f32 %v653, %v656
    %660 = vrot.lane.b32.xlu0 %v198, 96
    %v661 = vpop.permute.xlu0 %660
    %662 = vrot.lane.b32.xlu0 %v200, 96
    %v663 = vpop.permute.xlu0 %662
    %668 = vrot.lane.b32.xlu0 %v617, 64
    %v669 = vpop.permute.xlu0 %668
    %670 = vrot.lane.b32.xlu0 %v618, 64
    %v671 = vpop.permute.xlu0 %670
    %676 = vrot.lane.b32.xlu0 %v658, 96
    %v677 = vpop.permute.xlu0 %676
    %678 = vrot.lane.b32.xlu0 %v659, 96
    %v679 = vpop.permute.xlu0 %678
    %v682 = vsel %vm260, %v440, %v661
    %v683 = vsel %vm260, %v472, %v663
    %vm684 = vcmask 523264
    %v685 = vsel %vm684, %v682, %v669
    %v686 = vsel %vm684, %v683, %v671
    %v687 = vsel %vm184, %v685, %v677
    %v688 = vsel %vm184, %v686, %v679
    %v689 = vpack.c.bf16 %v688, %v687
    %v690 = vld [vmem:[%s3] sm:$0xf]
    %v691 = vld [vmem:[%s3 + $0x4] sm:$0xf]
    %v692 = vld [vmem:[%s3 + $0x8] sm:$0xf]
    %v693 = vld [vmem:[%s3 + $0xc] sm:$0xf]
    %v694 = vld [vmem:[%s3 + $0x10] sm:$0xf]
    %v695 = vld [vmem:[%s3 + $0x14] sm:$0xf]
    %v696 = vld [vmem:[%s3 + $0x18] sm:$0xf]
    %v697 = vld [vmem:[%s3 + $0x1c] sm:$0xf]
    %v698 = vld [vmem:[%s3 + $0x20] sm:$0xf]
    %v699 = vld [vmem:[%s3 + $0x24] sm:$0xf]
    %v700 = vld [vmem:[%s3 + $0x28] sm:$0xf]
    %v701 = vld [vmem:[%s3 + $0x2c] sm:$0xf]
    %v702 = vld [vmem:[%s3 + $0x30] sm:$0xf]
    %v703 = vld [vmem:[%s3 + $0x34] sm:$0xf]
    %v704 = vld [vmem:[%s3 + $0x38] sm:$0xf]
    %v705 = vld [vmem:[%s3 + $0x3c] sm:$0xf]
    %v706 = vld [vmem:[#allocation6] sm:$0x1]
    %v708 = vperm.slane %v706, 0
    %v726 = vunpack.c.l.b16 %v690
    %v727 = vunpack.c.l.b16 %v691
    %v728 = vunpack.c.l.b16 %v692
    %v729 = vunpack.c.l.b16 %v693
    %v730 = vunpack.c.l.b16 %v694
    %v731 = vunpack.c.l.b16 %v695
    %v732 = vunpack.c.l.b16 %v696
    %v733 = vunpack.c.l.b16 %v697
    %v734 = vunpack.c.l.b16 %v698
    %v735 = vunpack.c.l.b16 %v699
    %v736 = vunpack.c.l.b16 %v700
    %v737 = vunpack.c.l.b16 %v701
    %v738 = vunpack.c.l.b16 %v702
    %v739 = vunpack.c.l.b16 %v703
    %v740 = vunpack.c.l.b16 %v704
    %v741 = vunpack.c.l.b16 %v705
    %v742 = vpack.c.b16 %v727, %v726
    %v743 = vpack.c.b16 %v729, %v728
    %v744 = vpack.c.b16 %v731, %v730
    %v745 = vpack.c.b16 %v733, %v732
    %v746 = vpack.c.b16 %v735, %v734
    %v747 = vpack.c.b16 %v737, %v736
    %v748 = vpack.c.b16 %v739, %v738
    %v749 = vpack.c.b16 %v741, %v740
    %758 = vmatpush.bf16.msra.mxu0 %v749
    %759 = vmatpush.bf16.msra.mxu0 %v748
    %760 = vmatpush.bf16.msra.mxu0 %v747
    %761 = vmatpush.bf16.msra.mxu0 %v746
    %762 = vmatpush.bf16.msra.mxu0 %v745
    %763 = vmatpush.bf16.msra.mxu0 %v744
    %764 = vmatpush.bf16.msra.mxu0 %v743
    %765 = vmatpush.bf16.msra.mxu0 %v742
    %766 = vmatmul.bf16.gmra.mxu0 %v689
    %v767 = vpop.f32.mrf.mxu0
    %v768 = vadd.f32 %v708, %v767
    %v769 = vpop.f32.mrf.mxu0
    %v770 = vadd.f32 %v708, %v769
    %771 = vdwg.mxu0
    %772 = vst.msk [vmem:[#allocation2] sm:$0xff] %vm260, %v768
    %773 = vst.msk [vmem:[#allocation2 + $0x8] sm:$0xff] %vm260, %v770
    %v774 = vld [vmem:[#allocation2] ss:$4 sm:$0xf]
    %s775 = scalar_lea.vmem [#allocation2], 1
    %v776 = vld [vmem:[%s775] ss:$4 sm:$0xf]
    %s777 = scalar_lea.vmem [#allocation2], 2
    %v778 = vld [vmem:[%s777] ss:$4 sm:$0xf]
    %s779 = scalar_lea.vmem [#allocation2], 3
    %v780 = vld [vmem:[%s779] ss:$4 sm:$0xf]
    %782 = vrot.lane.b32.xlu0 %v776, 32
    %v783 = vpop.permute.xlu0 %782
    %786 = vrot.lane.b32.xlu0 %v778, 64
    %v787 = vpop.permute.xlu0 %786
    %790 = vrot.lane.b32.xlu0 %v780, 96
    %v791 = vpop.permute.xlu0 %790
    %v793 = vsel %vm260, %v774, %v783
    %v794 = vsel %vm684, %v793, %v787
    %v795 = vsel %vm184, %v794, %v791
    %796 = vst [vmem:[#allocation14] sm:$0xf] %v795
    // Predicated region
    $region74: #{tpu_custom_call.1} parent=1 // pred_check
      _
    $region75: #{tpu_custom_call.1} parent=1 // pred_check_branch
      %798 = sbr.rel (0) target = $region77
    $region76: #{tpu_custom_call.1} parent=1 // pred_region
      %800 = vsyncadd [#allocation5], 0
      %s802 = sshll.u32 [#allocation14], 4
      %s803 = int_to_ptr.vmem [resolvable:$true] %s802
      %s804 = sshll.u32 %s12, 4
      %s805 = int_to_ptr.hbm [resolvable:$true] %s804
      %807 = dma.vmem_to_hbm [thread:$0]  %s803, 64, %s805, [#allocation5]
    $region77: #{tpu_custom_call.1} parent=1 // pred_fallthru
      _
    // Predicated region
    $region78: #{tpu_custom_call.1} parent=1 // pred_check
      _
    $region79: #{tpu_custom_call.1} parent=1 // pred_check_branch
      %809 = sbr.rel (0) target = $region81
    $region80: #{tpu_custom_call.1} parent=1 // pred_region
      %811 = dma.done [#allocation5], 64
    $region81: #{tpu_custom_call.1} parent=1 // pred_fallthru
      _
    %812 = vsyncpa [#allocation4], 1
    %813 = vsyncpa [#allocation7], 1
    %814 = vsyncpa [#allocation10], 1
    %815 = vsyncpa [#allocation13], 1
    %816 = vsyncpa [#allocation5], 1

</llo_original>
